<compile_context>
chip_gen: v6e
topology: v6e:2x2x1
jax: 0.10.0
libtpu: 0.0.40
codegen_flags: <defaults>
</compile_context>

<pallas_src>
import functools

import jax
import jax.numpy as jnp
from jax.experimental import pallas as pl
from jax.experimental.pallas import tpu as pltpu


_DEFAULT_BLOCK_BYTES = 4 * 1024 * 1024       # per-step input block budget
_VMEM_LIMIT_BYTES = 48 * 1024 * 1024         # explicit scoped-VMEM limit


def _round_up(a, m):
    return -(-a // m) * m


def _sublane_multiple(dtype):
    itemsize = jnp.dtype(dtype).itemsize
    return {4: 8, 2: 16, 1: 32}.get(itemsize, 8)


# ---------------------------------------------------------------------------
# Path A: flattened (B*C, H*W) blocks — whole plane on the lane axis.
# ---------------------------------------------------------------------------

def _blur1_flat_kernel(idx_ref, x_ref, o_ref, *, H, W):
    """Separable [1,2,1]x[1,2,1]/16 blur, reflect borders fused.

    Block layout is (rows, H*W): horizontal taps are lane rolls by +/-1,
    vertical taps are lane rolls by +/-W.  Circular wrap values only land on
    positions that get the reflect fix-up, so they never leak into the
    output.  idx_ref is a resident (2, H*W) int32 block: row 0 = column
    index, row 1 = row index (precomputed on the host; no iota/div/mod here).
    """
    HW = H * W
    x = x_ref[...].astype(jnp.float32)                       # (rows, H*W)
    col = idx_ref[0:1, :]                                    # (1, H*W) int32
    row = idx_ref[1:2, :]

    # Horizontal pass: x[j-1] + 2 x[j] + x[j+1] with reflect at edges.
    xm = pltpu.roll(x, shift=1, axis=1)                      # x[..., j-1]
    xp = pltpu.roll(x, shift=HW - 1, axis=1)                 # x[..., j+1]
    left = jnp.where(col == 0, xp, xm)                       # x[-1]  -> x[1]
    right = jnp.where(col == W - 1, xm, xp)                  # x[W]   -> x[W-2]
    h = left + 2.0 * x + right                               # unnormalized

    # Vertical pass: shift by W lanes, reflect at top/bottom rows.
    hm = pltpu.roll(h, shift=W, axis=1)                      # h[i-1, :]
    hp = pltpu.roll(h, shift=HW - W, axis=1)                 # h[i+1, :]
    up = jnp.where(row == 0, hp, hm)                         # h[-1]  -> h[1]
    dn = jnp.where(row == H - 1, hm, hp)                     # h[H]   -> h[H-2]

    o_ref[...] = ((up + 2.0 * h + dn) * (1.0 / 16.0)).astype(o_ref.dtype)


def _blur1_flat(x, B, C, H, W, max_block_bytes, sub):
    BC, HW = B * C, H * W
    xf = x.reshape(BC, HW)

    # Chunk selection: largest multiple of `sub` sublanes fitting the budget
    # (f32 working size), capped so we keep >= 2-4 grid steps for pipelining
    # and v7x megacore sharding whenever B*C allows it.
    if BC <= sub:
        chunk = BC                                    # full-extent sublane dim
    else:
        fit = max(sub, (max_block_bytes // (HW * 4)) // sub * sub)
        bc_pad = _round_up(BC, sub)
        desired_steps = 4 if bc_pad >= 4 * sub else 2
        cap = max(sub, _round_up(-(-bc_pad // desired_steps), sub))
        chunk = min(fit, cap, bc_pad)
    grid = (pl.cdiv(BC, chunk),)

    # Host-side precompute of per-lane (col, row) indices; resident block.
    lane = jnp.arange(HW, dtype=jnp.int32)
    idx = jnp.stack([lane % W, lane // W])            # (2, H*W) int32

    out = pl.pallas_call(
        functools.partial(_blur1_flat_kernel, H=H, W=W),
        out_shape=jax.ShapeDtypeStruct((BC, HW), x.dtype),
        grid_spec=pltpu.PrefetchScalarGridSpec(
            num_scalar_prefetch=0,
            grid=grid,
            in_specs=[
                pl.BlockSpec((2, HW), lambda i: (0, 0)),       # resident idx
                pl.BlockSpec((chunk, HW), lambda i: (i, 0)),
            ],
            out_specs=pl.BlockSpec((chunk, HW), lambda i: (i, 0)),
        ),
        compiler_params=pltpu.CompilerParams(
            dimension_semantics=("parallel",),
            vmem_limit_bytes=_VMEM_LIMIT_BYTES,
        ),
    )(idx, xf)
    return out.reshape(B, C, H, W)


# ---------------------------------------------------------------------------
# Path B: H-tiled (1, TH, W) blocks with 8-row halo blocks (large planes).
# ---------------------------------------------------------------------------

def _blur1_htile_kernel(x_ref, top_ref, bot_ref, o_ref, *, H, W, TH):
    """Same blur, plane kept 2-D: vertical taps are sublane rolls.

    x_ref:   (1, TH, W) rows [j*TH, j*TH+TH) of one plane.
    top_ref: (1, 8, W)  8-row block whose last row is global row j*TH - 1
             (clamped at j == 0; value is dead there due to reflect fix-up).
    bot_ref: (1, 8, W)  8-row block whose first row is global row (j+1)*TH
             (clamped at the bottom; value is dead there).
    """
    j = pl.program_id(1)

    x = x_ref[0].astype(jnp.float32)                          # (TH, W)
    top = top_ref[0, 7:8, :].astype(jnp.float32)              # (1, W)
    bot = bot_ref[0, 0:1, :].astype(jnp.float32)              # (1, W)

    col = jax.lax.broadcasted_iota(jnp.int32, (1, W), 1)
    lrow = jax.lax.broadcasted_iota(jnp.int32, (TH, 1), 0)
    grow = lrow + j * TH                                      # global row idx

    def hpass(a):
        am = pltpu.roll(a, shift=1, axis=1)                   # a[:, c-1]
        ap = pltpu.roll(a, shift=W - 1, axis=1)               # a[:, c+1]
        l = jnp.where(col == 0, ap, am)
        r = jnp.where(col == W - 1, am, ap)
        return l + 2.0 * a + r

    h = hpass(x)                                              # (TH, W)
    ht = hpass(top)                                           # (1, W)
    hb = hpass(bot)                                           # (1, W)

    # Vertical taps: cheap sublane rolls, halo rows patched at tile edges,
    # then global reflect fix-up at image top/bottom.
    hm = pltpu.roll(h, shift=1, axis=0)                       # h[r-1]
    hp = pltpu.roll(h, shift=TH - 1, axis=0)                  # h[r+1]
    up0 = jnp.where(lrow == 0, ht, hm)
    dn0 = jnp.where(lrow == TH - 1, hb, hp)
    up = jnp.where(grow == 0, dn0, up0)                       # row -1 -> row 1
    dn = jnp.where(grow == H - 1, up0, dn0)                   # row H  -> row H-2

    o_ref[0] = ((up + 2.0 * h + dn) * (1.0 / 16.0)).astype(o_ref.dtype)


def _blur1_htiled(x, B, C, H, W, max_block_bytes):
    BC = B * C
    x3 = x.reshape(BC, H, W)

    row_bytes = W * 4
    th_fit = max(8, (max_block_bytes // row_bytes) // 8 * 8)
    TH = min(th_fit, _round_up(H, 8))
    n_th = pl.cdiv(H, TH)
    th_blocks = TH // 8
    last_h8 = pl.cdiv(H, 8) - 1

    def center_map(i, j):
        return (i, j, 0)

    def top_map(i, j):  # 8-row block containing global row j*TH - 1
        return (i, jnp.maximum(j * th_blocks - 1, 0), 0)

    def bot_map(i, j):  # 8-row block containing global row (j+1)*TH
        return (i, jnp.minimum((j + 1) * th_blocks, last_h8), 0)

    out = pl.pallas_call(
        functools.partial(_blur1_htile_kernel, H=H, W=W, TH=TH),
        out_shape=jax.ShapeDtypeStruct((BC, H, W), x.dtype),
        grid_spec=pltpu.PrefetchScalarGridSpec(
            num_scalar_prefetch=0,
            grid=(BC, n_th),
            in_specs=[
                pl.BlockSpec((1, TH, W), center_map),
                pl.BlockSpec((1, 8, W), top_map),
                pl.BlockSpec((1, 8, W), bot_map),
            ],
            out_specs=pl.BlockSpec((1, TH, W), center_map),
        ),
        compiler_params=pltpu.CompilerParams(
            dimension_semantics=("parallel", "parallel"),
            vmem_limit_bytes=_VMEM_LIMIT_BYTES,
        ),
    )(x3, x3, x3)
    return out.reshape(B, C, H, W)


# ---------------------------------------------------------------------------
# Wrapper
# ---------------------------------------------------------------------------

def blur1(x, *, max_block_bytes=_DEFAULT_BLOCK_BYTES):
    """Blur1.forward: filter2D(x, [1,2,1]^T @ [1,2,1], normalized, reflect)."""
    B, C, H, W = x.shape
    if H < 2 or W < 2:
        raise ValueError("Blur1 reflect padding requires H >= 2 and W >= 2.")
    BC, HW = B * C, H * W
    sub = _sublane_multiple(x.dtype)

    # Flattened lane-dense path if at least a minimal sublane block of whole
    # planes fits the budget (f32 working size); otherwise tile along H with
    # halo rows and sublane rolls for the vertical taps.
    if HW * 4 * min(sub, BC) <= max_block_bytes:
        return _blur1_flat(x, B, C, H, W, max_block_bytes, sub)
    return _blur1_htiled(x, B, C, H, W, max_block_bytes)


# ---------------------------------------------------------------------------
# Pure-JAX reference (matches filter2D: normalized 3x3, reflect padding)
# ---------------------------------------------------------------------------

def blur1_reference(x):
    k = jnp.array([1.0, 2.0, 1.0], jnp.float32)
    k2 = (k[:, None] * k[None, :]) / 16.0
    B, C, H, W = x.shape
    xp = jnp.pad(x, ((0, 0), (0, 0), (1, 1), (1, 1)), mode="reflect")
    out = jnp.zeros_like(x)
    for di in range(3):
        for dj in range(3):
            out = out + k2[di, dj] * xp[:, :, di:di + H, dj:dj + W]
    return out


if __name__ == "__main__":
    key = jax.random.PRNGKey(0)
    k1, k2, k3 = jax.random.split(key, 3)

    # Small NCHW input; B*C = 8 sublanes, H*W = 256 lanes (flattened path).
    x = jax.random.normal(k1, (2, 4, 16, 16), jnp.float32)
    out = jax.block_until_ready(jax.jit(blur1)(x))
    ref = blur1_reference(x)
    assert out.shape == x.shape, out.shape
    assert bool(jnp.all(jnp.isfinite(out)))
    assert bool(jnp.allclose(out, ref, atol=1e-5, rtol=1e-5))

    # Odd channel count / rectangular plane exercises the full-extent block
    # and the ragged-safe chunking.
    x2 = jax.random.normal(k2, (1, 3, 16, 24), jnp.float32)
    out2 = jax.block_until_ready(jax.jit(blur1)(x2))
    assert out2.shape == x2.shape, out2.shape
    assert bool(jnp.allclose(out2, blur1_reference(x2), atol=1e-5, rtol=1e-5))

    # Force the H-tiled halo path (TH=32 on H=40: ragged last tile, both
    # halo directions, sublane-roll vertical taps).
    x3 = jax.random.normal(k3, (1, 2, 40, 128), jnp.float32)
    blur_small = jax.jit(functools.partial(blur1, max_block_bytes=16 * 1024))
    out3 = jax.block_until_ready(blur_small(x3))
    assert out3.shape == x3.shape, out3.shape
    assert bool(jnp.allclose(out3, blur1_reference(x3), atol=1e-5, rtol=1e-5))

    print("KERNEL_OK")
</pallas_src>

<mosaic_0001>
module attributes {stable_mosaic.version = 11 : i64} {
  func.func @_blur1_flat_kernel(%arg0: i32, %arg1: memref<2x256xi32, #tpu.memory_space<vmem>>, %arg2: memref<8x256xf32, #tpu.memory_space<vmem>>, %arg3: memref<8x256xf32, #tpu.memory_space<vmem>>) attributes {dimension_semantics = [#tpu.dimension_semantics<parallel>], iteration_bounds = array<i64: 1>, scalar_prefetch = 0 : i64, scratch_operands = 0 : i64, tpu.core_type = #tpu.core_type<tc>, window_params = [{pipeline_mode = #tpu.pipeline_mode<synchronous>, transform_indices = @transform_0, window_bounds = array<i64: 2, 256>}, {transform_indices = @transform_1, window_bounds = array<i64: 8, 256>}, {transform_indices = @transform_2, window_bounds = array<i64: 8, 256>}]} {
    %c0 = arith.constant 0 : index
    %c0_0 = arith.constant 0 : index
    %0 = vector.load %arg2[%c0, %c0_0] : memref<8x256xf32, #tpu.memory_space<vmem>>, vector<8x256xf32>
    %c0_1 = arith.constant 0 : index
    %c0_2 = arith.constant 0 : index
    %1 = vector.load %arg1[%c0_1, %c0_2] : memref<2x256xi32, #tpu.memory_space<vmem>>, vector<1x256xi32>
    %c1 = arith.constant 1 : index
    %c0_3 = arith.constant 0 : index
    %2 = vector.load %arg1[%c1, %c0_3] : memref<2x256xi32, #tpu.memory_space<vmem>>, vector<1x256xi32>
    %c1_i32 = arith.constant 1 : i32
    %3 = tpu.dynamic_rotate %0 by %c1_i32 dim 1 : vector<8x256xf32>, i32 -> vector<8x256xf32>
    %c255_i32 = arith.constant 255 : i32
    %4 = tpu.dynamic_rotate %0 by %c255_i32 dim 1 : vector<8x256xf32>, i32 -> vector<8x256xf32>
    %c0_i32 = arith.constant 0 : i32
    %5 = vector.broadcast %c0_i32 : i32 to vector<1x256xi32>
    %6 = arith.cmpi eq, %1, %5 : vector<1x256xi32>
    %7 = vector.shape_cast %6 : vector<1x256xi1> to vector<1x256xi1>
    %8 = vector.broadcast %7 : vector<1x256xi1> to vector<8x256xi1>
    %9 = arith.select %8, %4, %3 : vector<8x256xi1>, vector<8x256xf32>
    %c15_i32 = arith.constant 15 : i32
    %10 = vector.broadcast %c15_i32 : i32 to vector<1x256xi32>
    %11 = arith.cmpi eq, %1, %10 : vector<1x256xi32>
    %12 = vector.shape_cast %11 : vector<1x256xi1> to vector<1x256xi1>
    %13 = vector.broadcast %12 : vector<1x256xi1> to vector<8x256xi1>
    %14 = arith.select %13, %3, %4 : vector<8x256xi1>, vector<8x256xf32>
    %cst = arith.constant 2.000000e+00 : f32
    %15 = vector.broadcast %cst : f32 to vector<8x256xf32>
    %16 = arith.mulf %15, %0 : vector<8x256xf32>
    %17 = arith.addf %9, %16 : vector<8x256xf32>
    %18 = arith.addf %17, %14 : vector<8x256xf32>
    %c16_i32 = arith.constant 16 : i32
    %19 = tpu.dynamic_rotate %18 by %c16_i32 dim 1 : vector<8x256xf32>, i32 -> vector<8x256xf32>
    %c240_i32 = arith.constant 240 : i32
    %20 = tpu.dynamic_rotate %18 by %c240_i32 dim 1 : vector<8x256xf32>, i32 -> vector<8x256xf32>
    %c0_i32_4 = arith.constant 0 : i32
    %21 = vector.broadcast %c0_i32_4 : i32 to vector<1x256xi32>
    %22 = arith.cmpi eq, %2, %21 : vector<1x256xi32>
    %23 = vector.shape_cast %22 : vector<1x256xi1> to vector<1x256xi1>
    %24 = vector.broadcast %23 : vector<1x256xi1> to vector<8x256xi1>
    %25 = arith.select %24, %20, %19 : vector<8x256xi1>, vector<8x256xf32>
    %c15_i32_5 = arith.constant 15 : i32
    %26 = vector.broadcast %c15_i32_5 : i32 to vector<1x256xi32>
    %27 = arith.cmpi eq, %2, %26 : vector<1x256xi32>
    %28 = vector.shape_cast %27 : vector<1x256xi1> to vector<1x256xi1>
    %29 = vector.broadcast %28 : vector<1x256xi1> to vector<8x256xi1>
    %30 = arith.select %29, %19, %20 : vector<8x256xi1>, vector<8x256xf32>
    %cst_6 = arith.constant 2.000000e+00 : f32
    %31 = vector.broadcast %cst_6 : f32 to vector<8x256xf32>
    %32 = arith.mulf %31, %18 : vector<8x256xf32>
    %33 = arith.addf %25, %32 : vector<8x256xf32>
    %34 = arith.addf %33, %30 : vector<8x256xf32>
    %cst_7 = arith.constant 6.250000e-02 : f32
    %35 = vector.broadcast %cst_7 : f32 to vector<8x256xf32>
    %36 = arith.mulf %34, %35 : vector<8x256xf32>
    %c0_8 = arith.constant 0 : index
    %c0_9 = arith.constant 0 : index
    %37 = vector.load %arg3[%c0_8, %c0_9] : memref<8x256xf32, #tpu.memory_space<vmem>>, vector<8x256xf32>
    tpu.vector_store %arg3[%c0_8, %c0_9], %36 {strides = array<i32>} : memref<8x256xf32, #tpu.memory_space<vmem>>, vector<8x256xf32>,
    return
  }
  func.func @transform_0(%arg0: i32) -> (i32, i32) {
    %c0_i32 = arith.constant 0 : i32
    %c0_i32_0 = arith.constant 0 : i32
    %c0_i32_1 = arith.constant 0 : i32
    return %c0_i32, %c0_i32_0 : i32, i32
  }
  func.func @transform_1(%arg0: i32) -> (i32, i32) {
    %c0_i32 = arith.constant 0 : i32
    %c0_i32_0 = arith.constant 0 : i32
    return %arg0, %c0_i32 : i32, i32
  }
  func.func @transform_2(%arg0: i32) -> (i32, i32) {
    %c0_i32 = arith.constant 0 : i32
    %c0_i32_0 = arith.constant 0 : i32
    return %arg0, %c0_i32 : i32, i32
  }
}

</mosaic_0001>

<llo_original>
// kernel: blur1.1
$region0: #{blur1.1}
  #allocation0 [shape = 'u32[]', space=smem, size = 0x4, offset = 0x4, fixed_abs, tag = 'smem constant byte address 0x4 - core index']
  #allocation1 [shape = 'u32[144,128]{1,0:T(1,128)}', space=vmem, size = 0x12000, scoped, tag = 'internal scratch']
  %s0 = inlined_call_operand.vmem [shape: s32[2,256], index: 0, kind: input, shape index: {}]
  %s1 = inlined_call_operand.vmem [shape: f32[8,256], index: 1, kind: input, shape index: {}]
  %s2 = inlined_call_operand.vmem [shape: f32[8,256], index: 2, kind: output, shape index: {}]
  %s3 = sld [smem:[#allocation0]]
  $region18: #{blur1.1} parent=0
    _
  %s5 = ssub.s32 1, %s3
  %s6 = scalar_select 0, %s5, %s3
  // Predicated region
  $region2: #{blur1.1} parent=0 // pred_check
    _
  $region3: #{blur1.1} parent=0 // pred_check_branch
    %8 = sbr.rel (0) target = $region5
  $region4: #{blur1.1} parent=0 // pred_region
    _
  $region5: #{blur1.1} parent=0 // pred_fallthru
    _
  // Predicated region
  $region6: #{blur1.1} parent=0 // pred_check
    _
  $region7: #{blur1.1} parent=0 // pred_check_branch
    %10 = sbr.rel (0) target = $region9
  $region8: #{blur1.1} parent=0 // pred_region
    _
  $region9: #{blur1.1} parent=0 // pred_fallthru
    _
  %v11 = vld [vmem:[%s1] sm:$0xff]
  %v12 = vld [vmem:[%s1 + $0x8] sm:$0xff]
  %v13 = vld [vmem:[%s0] ss:$2 sm:$0x3]
  %s14 = scalar_lea.vmem %s0, 1
  %v15 = vld [vmem:[%s14] ss:$2 sm:$0x3]
  %16 = vrot.lane.b32.xlu0 %v11, 1
  %v17 = vpop.permute.xlu0 %16
  %18 = vrot.lane.b32.xlu0 %v12, 1
  %v19 = vpop.permute.xlu0 %18
  %v20 = vlaneseq
  %v21 = vand.u32 %v20, 127
  %vm22 = vcmp.lt.s32.totalorder %v21, 1
  %v23 = vsel %vm22, %v17, %v19
  %v24 = vsel %vm22, %v19, %v17
  %25 = vrot.lane.b32.xlu0 %v11, 127
  %v26 = vpop.permute.xlu0 %25
  %27 = vrot.lane.b32.xlu0 %v12, 127
  %v28 = vpop.permute.xlu0 %27
  %vm29 = vcmp.lt.s32.totalorder %v21, 127
  %v30 = vsel %vm29, %v26, %v28
  %v31 = vsel %vm29, %v28, %v26
  %vm32 = vcmp.eq.s32.totalorder %v13, 0
  %v33 = vsel %vm32, 1, 0
  %v34 = vlaneseq
  %v35 = vshrl.u32 %v34, 7
  %v36 = vsub.s32 0, %v35
  %v37 = vrot.slane %v33, %v36
  %v38 = vlaneseq
  %v39 = vshrl.u32 %v38, 7
  %v40 = vsub.s32 1, %v39
  %v41 = vrot.slane %v33, %v40
  %vm42 = vcmp.eq.s32.totalorder %v37, 1
  %vm43 = vcmp.eq.s32.totalorder %v41, 1
  %v44 = vsel %vm42, %v30, %v24
  %v45 = vsel %vm43, %v31, %v23
  %vm46 = vcmp.eq.s32.totalorder %v13, 15
  %v47 = vsel %vm46, 1, 0
  %v48 = vlaneseq
  %v49 = vshrl.u32 %v48, 7
  %v50 = vsub.s32 0, %v49
  %v51 = vrot.slane %v47, %v50
  %v52 = vlaneseq
  %v53 = vshrl.u32 %v52, 7
  %v54 = vsub.s32 1, %v53
  %v55 = vrot.slane %v47, %v54
  %vm56 = vcmp.eq.s32.totalorder %v51, 1
  %vm57 = vcmp.eq.s32.totalorder %v55, 1
  %v58 = vsel %vm56, %v24, %v30
  %v59 = vsel %vm57, %v23, %v31
  %v60 = vmul.f32 %v11, 2.0
  %v61 = vmul.f32 %v12, 2.0
  %v62 = vadd.f32 %v44, %v60
  %v63 = vadd.f32 %v45, %v61
  %v64 = vadd.f32 %v62, %v58
  %v65 = vadd.f32 %v63, %v59
  %66 = vrot.lane.b32.xlu0 %v64, 16
  %v67 = vpop.permute.xlu0 %66
  %68 = vrot.lane.b32.xlu0 %v65, 16
  %v69 = vpop.permute.xlu0 %68
  %vm70 = vcmp.lt.s32.totalorder %v21, 16
  %v71 = vsel %vm70, %v67, %v69
  %v72 = vsel %vm70, %v69, %v67
  %73 = vrot.lane.b32.xlu0 %v64, 112
  %v74 = vpop.permute.xlu0 %73
  %75 = vrot.lane.b32.xlu0 %v65, 112
  %v76 = vpop.permute.xlu0 %75
  %vm77 = vcmp.lt.s32.totalorder %v21, 112
  %v78 = vsel %vm77, %v74, %v76
  %v79 = vsel %vm77, %v76, %v74
  %vm80 = vcmp.eq.s32.totalorder %v15, 0
  %v81 = vsel %vm80, 1, 0
  %v82 = vlaneseq
  %v83 = vshrl.u32 %v82, 7
  %v84 = vsub.s32 0, %v83
  %v85 = vrot.slane %v81, %v84
  %v86 = vlaneseq
  %v87 = vshrl.u32 %v86, 7
  %v88 = vsub.s32 1, %v87
  %v89 = vrot.slane %v81, %v88
  %vm90 = vcmp.eq.s32.totalorder %v85, 1
  %vm91 = vcmp.eq.s32.totalorder %v89, 1
  %v92 = vsel %vm90, %v78, %v72
  %v93 = vsel %vm91, %v79, %v71
  %vm94 = vcmp.eq.s32.totalorder %v15, 15
  %v95 = vsel %vm94, 1, 0
  %v96 = vlaneseq
  %v97 = vshrl.u32 %v96, 7
  %v98 = vsub.s32 0, %v97
  %v99 = vrot.slane %v95, %v98
  %v100 = vlaneseq
  %v101 = vshrl.u32 %v100, 7
  %v102 = vsub.s32 1, %v101
  %v103 = vrot.slane %v95, %v102
  %vm104 = vcmp.eq.s32.totalorder %v99, 1
  %vm105 = vcmp.eq.s32.totalorder %v103, 1
  %v106 = vsel %vm104, %v72, %v78
  %v107 = vsel %vm105, %v71, %v79
  %v108 = vmul.f32 %v64, 2.0
  %v109 = vmul.f32 %v65, 2.0
  %v110 = vadd.f32 %v92, %v108
  %v111 = vadd.f32 %v93, %v109
  %v112 = vadd.f32 %v110, %v106
  %v113 = vadd.f32 %v111, %v107
  %v114 = vmul.f32 %v112, 0.0625
  %v115 = vmul.f32 %v113, 0.0625
  %116 = vst [vmem:[%s2] sm:$0xff] %v114
  %117 = vst [vmem:[%s2 + $0x8] sm:$0xff] %v115
  // Predicated region
  $region10: #{blur1.1} parent=0 // pred_check
    _
  $region11: #{blur1.1} parent=0 // pred_check_branch
    %119 = sbr.rel (0) target = $region13
  $region12: #{blur1.1} parent=0 // pred_region
    _
  $region13: #{blur1.1} parent=0 // pred_fallthru
    _
  // Predicated region
  $region14: #{blur1.1} parent=0 // pred_check
    _
  $region15: #{blur1.1} parent=0 // pred_check_branch
    %121 = sbr.rel (0) target = $region17
  $region16: #{blur1.1} parent=0 // pred_region
    _
  $region17: #{blur1.1} parent=0 // pred_fallthru
    _

</llo_original>
